<compile_context>
chip_gen: v5e
topology: v5e:2x2
jax: 0.10.0
libtpu: 0.0.40
codegen_flags: <defaults>
</compile_context>

<pallas_src>
import jax
import jax.numpy as jnp
from jax import lax
from jax.experimental import pallas as pl
from jax.experimental.pallas import tpu as pltpu


def _round_up(x, m):
    return (x + m - 1) // m * m


def _im2col_nchw_t(x, k, stride):
    """Plain-JAX glue: extract conv patches in transposed layout.

    x: (N, Cin, H, W) -> (N, Cin*k*k, Ho*Wo), flat index = cin*k*k + di*k + dj,
    matching nn.Conv2d weight.reshape(Cout, Cin*k*k) ordering."""
    N, C, H, W = x.shape
    pad = (k - 1) // 2
    xp = jnp.pad(x, ((0, 0), (0, 0), (pad, pad), (pad, pad)))
    Ho = (H + 2 * pad - k) // stride + 1
    Wo = (W + 2 * pad - k) // stride + 1
    cols = []
    for di in range(k):
        for dj in range(k):
            cols.append(
                xp[:, :, di:di + stride * Ho:stride, dj:dj + stride * Wo:stride])
    patches = jnp.stack(cols, axis=2)                 # (N, Cin, k*k, Ho, Wo)
    patches = patches.reshape(N, C * k * k, Ho * Wo)  # (N, CK2, HW)
    return patches, Ho, Wo


def _conv2d_attn_kernel(patches_ref, w_ref, o_ref):
    """One grid step = one batch element.

    patches_ref: (1, CK2_p, HW), w_ref: (Cout_p, CK2_p), o_ref: (1, Cout_p, HW).
    HW is on the lane axis; channels on the sublane axis."""
    p = patches_ref[0]                     # (CK2_p, HW)
    w = w_ref[...]                         # (Cout_p, CK2_p)

    # --- conv as MXU matmul (bias=False since bn=True); matmul N-dim = HW ---
    x = jnp.dot(w, p, preferred_element_type=jnp.float32)   # (Cout_p, HW)

    hw = x.shape[1]                        # static python int
    inv_hw = jnp.float32(1.0 / hw)
    inv_n = jnp.float32(1.0 / (hw - 1))    # 1 / (w*h - 1)

    # --- SimAM attention ----------------------------------------------------
    # mu, (x - mu)^2, sum((x - mu)^2)  -- two-pass per-channel stats over HW,
    # matching the reference exactly; divisions happen on (Cout_p, 1) columns.
    mu = jnp.sum(x, axis=1, keepdims=True) * inv_hw           # (Cout_p, 1)
    xm = x - mu
    d2 = xm * xm                                               # (Cout_p, HW)
    ssd = jnp.sum(d2, axis=1, keepdims=True)                   # (Cout_p, 1)
    inv_den = 1.0 / (4.0 * (ssd * inv_n + 1e-4))               # (Cout_p, 1)
    y = d2 * inv_den + 0.5
    x = x * jax.nn.sigmoid(y)

    # --- InstanceNorm2d (affine=False, eps=1e-5, biased variance over HW) ---
    mu2 = jnp.sum(x, axis=1, keepdims=True) * inv_hw           # (Cout_p, 1)
    xc = x - mu2
    var = jnp.sum(xc * xc, axis=1, keepdims=True) * inv_hw     # (Cout_p, 1)
    x = xc * lax.rsqrt(var + 1e-5)

    # --- ReLU ---------------------------------------------------------------
    x = jnp.maximum(x, 0.0)

    o_ref[0] = x.astype(o_ref.dtype)


def conv2d_attn(x_nchw, weight, *, kernel_size=3, stride=1):
    """Forward pass of Conv2dAttn (bn=True, relu=True -> conv has bias=False).

    x_nchw: (N, Cin, H, W), weight: (Cout, Cin, k, k). Returns (N, Cout, Ho, Wo)."""
    N, Cin, H, W = x_nchw.shape
    Cout = weight.shape[0]
    k = kernel_size

    patches, Ho, Wo = _im2col_nchw_t(x_nchw, k, stride)      # (N, CK2, HW)
    HW = Ho * Wo
    CK2 = Cin * k * k

    # Pad channel-ish dims to sublane multiples so all tiles are aligned.
    CK2_p = _round_up(CK2, 8)
    Cout_p = _round_up(Cout, 8)

    if CK2_p != CK2:
        patches = jnp.pad(patches, ((0, 0), (0, CK2_p - CK2), (0, 0)))
    w2d = weight.reshape(Cout, CK2)
    if CK2_p != CK2 or Cout_p != Cout:
        w2d = jnp.pad(w2d, ((0, Cout_p - Cout), (0, CK2_p - CK2)))

    out = pl.pallas_call(
        _conv2d_attn_kernel,
        out_shape=jax.ShapeDtypeStruct((N, Cout_p, HW), x_nchw.dtype),
        grid_spec=pltpu.PrefetchScalarGridSpec(
            num_scalar_prefetch=0,
            grid=(N,),
            in_specs=[
                pl.BlockSpec((1, CK2_p, HW), lambda n: (n, 0, 0)),
                # Weight block index is grid-invariant -> fetched once by the
                # pipeline (no per-step re-DMA); the buffer is tiny.
                pl.BlockSpec((Cout_p, CK2_p), lambda n: (0, 0)),
            ],
            out_specs=pl.BlockSpec((1, Cout_p, HW), lambda n: (n, 0, 0)),
        ),
        compiler_params=pltpu.CompilerParams(
            dimension_semantics=("parallel",)),
    )(patches, w2d)

    # Drop padded output channels; (N, Cout, HW) -> NCHW is a free reshape.
    return out[:, :Cout, :].reshape(N, Cout, Ho, Wo)


def _reference(x_nchw, weight, kernel_size=3, stride=1):
    """Pure-JAX reference mirroring the PyTorch module (for correctness check)."""
    pad = (kernel_size - 1) // 2
    x = lax.conv_general_dilated(
        x_nchw, weight, window_strides=(stride, stride),
        padding=((pad, pad), (pad, pad)),
        dimension_numbers=("NCHW", "OIHW", "NCHW"))
    _, _, h, w = x.shape
    n = w * h - 1
    mu = x.mean(axis=(2, 3), keepdims=True)
    d2 = (x - mu) ** 2
    y = d2 / (4 * (d2.sum(axis=(2, 3), keepdims=True) / n + 1e-4)) + 0.5
    x = x * jax.nn.sigmoid(y)
    mu2 = x.mean(axis=(2, 3), keepdims=True)
    var = ((x - mu2) ** 2).mean(axis=(2, 3), keepdims=True)
    x = (x - mu2) / jnp.sqrt(var + 1e-5)
    return jnp.maximum(x, 0.0)


if __name__ == "__main__":
    key = jax.random.PRNGKey(0)
    kx, kw = jax.random.split(key)

    N, Cin, H, W = 2, 4, 16, 16
    Cout, k, stride = 8, 3, 1

    x = jax.random.normal(kx, (N, Cin, H, W), dtype=jnp.float32)
    # Deterministic Kaiming-uniform-like init for the conv weight.
    fan_in = Cin * k * k
    bound = (1.0 / fan_in) ** 0.5
    weight = jax.random.uniform(kw, (Cout, Cin, k, k), dtype=jnp.float32,
                                minval=-bound, maxval=bound)

    out = conv2d_attn(x, weight, kernel_size=k, stride=stride)
    out = jax.block_until_ready(out)

    ref = _reference(x, weight, kernel_size=k, stride=stride)
    assert out.shape == (N, Cout, H, W)
    assert jnp.allclose(out, ref, atol=1e-4, rtol=1e-4)

    print("KERNEL_OK")
</pallas_src>

<mosaic_0001>
module attributes {stable_mosaic.version = 11 : i64} {
  func.func @_conv2d_attn_kernel(%arg0: i32, %arg1: memref<1x40x256xf32, #tpu.memory_space<vmem>>, %arg2: memref<8x40xf32, #tpu.memory_space<vmem>>, %arg3: memref<1x8x256xf32, #tpu.memory_space<vmem>>) attributes {dimension_semantics = [#tpu.dimension_semantics<parallel>], iteration_bounds = array<i64: 2>, scalar_prefetch = 0 : i64, scratch_operands = 0 : i64, tpu.core_type = #tpu.core_type<tc>, window_params = [{transform_indices = @transform_0, window_bounds = array<i64: 1, 40, 256>}, {pipeline_mode = #tpu.pipeline_mode<synchronous>, transform_indices = @transform_1, window_bounds = array<i64: 8, 40>}, {transform_indices = @transform_2, window_bounds = array<i64: 1, 8, 256>}]} {
    %c0 = arith.constant 0 : index
    %c0_0 = arith.constant 0 : index
    %c0_1 = arith.constant 0 : index
    %0 = vector.load %arg1[%c0, %c0_0, %c0_1] : memref<1x40x256xf32, #tpu.memory_space<vmem>>, vector<1x40x256xf32>
    %1 = vector.shape_cast %0 : vector<1x40x256xf32> to vector<40x256xf32>
    %c0_2 = arith.constant 0 : index
    %c0_3 = arith.constant 0 : index
    %2 = vector.load %arg2[%c0_2, %c0_3] : memref<8x40xf32, #tpu.memory_space<vmem>>, vector<8x40xf32>
    %cst = arith.constant dense<0.000000e+00> : vector<8x256xf32>
    %3 = tpu.matmul %2, %1, %cst {dimension_numbers = #tpu.dot_dimension_numbers<[1], [0], [0], [1], [0, 0, 1, 1], [], []>} : vector<8x40xf32>, vector<40x256xf32>, vector<8x256xf32> -> vector<8x256xf32>
    %cst_4 = arith.constant dense<0.000000e+00> : vector<8xf32>
    %4 = vector.multi_reduction <add>, %3, %cst_4 [1] : vector<8x256xf32> to vector<8xf32>
    %5 = vector.shape_cast %4 : vector<8xf32> to vector<8x1xf32>
    %cst_5 = arith.constant 3.906250e-03 : f32
    %6 = vector.broadcast %cst_5 : f32 to vector<8x1xf32>
    %7 = arith.mulf %5, %6 : vector<8x1xf32>
    %8 = vector.broadcast %7 : vector<8x1xf32> to vector<8x256xf32>
    %9 = arith.subf %3, %8 : vector<8x256xf32>
    %10 = arith.mulf %9, %9 : vector<8x256xf32>
    %cst_6 = arith.constant dense<0.000000e+00> : vector<8xf32>
    %11 = vector.multi_reduction <add>, %10, %cst_6 [1] : vector<8x256xf32> to vector<8xf32>
    %12 = vector.shape_cast %11 : vector<8xf32> to vector<8x1xf32>
    %cst_7 = arith.constant 0.00392156886 : f32
    %13 = vector.broadcast %cst_7 : f32 to vector<8x1xf32>
    %14 = arith.mulf %12, %13 : vector<8x1xf32>
    %cst_8 = arith.constant 9.99999974E-5 : f32
    %15 = vector.broadcast %cst_8 : f32 to vector<8x1xf32>
    %16 = arith.addf %14, %15 : vector<8x1xf32>
    %cst_9 = arith.constant 4.000000e+00 : f32
    %17 = vector.broadcast %cst_9 : f32 to vector<8x1xf32>
    %18 = arith.mulf %17, %16 : vector<8x1xf32>
    %cst_10 = arith.constant 1.000000e+00 : f32
    %19 = vector.broadcast %cst_10 : f32 to vector<8x1xf32>
    %20 = arith.divf %19, %18 : vector<8x1xf32>
    %21 = vector.broadcast %20 : vector<8x1xf32> to vector<8x256xf32>
    %22 = arith.mulf %10, %21 : vector<8x256xf32>
    %cst_11 = arith.constant 5.000000e-01 : f32
    %23 = vector.broadcast %cst_11 : f32 to vector<8x256xf32>
    %24 = arith.addf %22, %23 : vector<8x256xf32>
    %25 = arith.negf %24 : vector<8x256xf32>
    %26 = math.exp %25 : vector<8x256xf32>
    %cst_12 = arith.constant 1.000000e+00 : f32
    %27 = vector.broadcast %cst_12 : f32 to vector<8x256xf32>
    %28 = arith.addf %27, %26 : vector<8x256xf32>
    %29 = arith.divf %27, %28 : vector<8x256xf32>
    %30 = arith.mulf %3, %29 : vector<8x256xf32>
    %cst_13 = arith.constant dense<0.000000e+00> : vector<8xf32>
    %31 = vector.multi_reduction <add>, %30, %cst_13 [1] : vector<8x256xf32> to vector<8xf32>
    %32 = vector.shape_cast %31 : vector<8xf32> to vector<8x1xf32>
    %cst_14 = arith.constant 3.906250e-03 : f32
    %33 = vector.broadcast %cst_14 : f32 to vector<8x1xf32>
    %34 = arith.mulf %32, %33 : vector<8x1xf32>
    %35 = vector.broadcast %34 : vector<8x1xf32> to vector<8x256xf32>
    %36 = arith.subf %30, %35 : vector<8x256xf32>
    %37 = arith.mulf %36, %36 : vector<8x256xf32>
    %cst_15 = arith.constant dense<0.000000e+00> : vector<8xf32>
    %38 = vector.multi_reduction <add>, %37, %cst_15 [1] : vector<8x256xf32> to vector<8xf32>
    %39 = vector.shape_cast %38 : vector<8xf32> to vector<8x1xf32>
    %cst_16 = arith.constant 3.906250e-03 : f32
    %40 = vector.broadcast %cst_16 : f32 to vector<8x1xf32>
    %41 = arith.mulf %39, %40 : vector<8x1xf32>
    %cst_17 = arith.constant 9.99999974E-6 : f32
    %42 = vector.broadcast %cst_17 : f32 to vector<8x1xf32>
    %43 = arith.addf %41, %42 : vector<8x1xf32>
    %44 = math.rsqrt %43 : vector<8x1xf32>
    %45 = vector.broadcast %44 : vector<8x1xf32> to vector<8x256xf32>
    %46 = arith.mulf %36, %45 : vector<8x256xf32>
    %cst_18 = arith.constant 0.000000e+00 : f32
    %47 = vector.broadcast %cst_18 : f32 to vector<8x256xf32>
    %48 = arith.maximumf %46, %47 : vector<8x256xf32>
    %c0_19 = arith.constant 0 : index
    %c0_20 = arith.constant 0 : index
    %c0_21 = arith.constant 0 : index
    %49 = vector.load %arg3[%c0_19, %c0_20, %c0_21] : memref<1x8x256xf32, #tpu.memory_space<vmem>>, vector<1x8x256xf32>
    %50 = vector.shape_cast %49 : vector<1x8x256xf32> to vector<8x256xf32>
    %51 = vector.shape_cast %48 : vector<8x256xf32> to vector<1x8x256xf32>
    tpu.vector_store %arg3[%c0_19, %c0_20, %c0_21], %51 {strides = array<i32>} : memref<1x8x256xf32, #tpu.memory_space<vmem>>, vector<1x8x256xf32>,
    return
  }
  func.func @transform_0(%arg0: i32) -> (i32, i32, i32) {
    %c0_i32 = arith.constant 0 : i32
    %c0_i32_0 = arith.constant 0 : i32
    %c0_i32_1 = arith.constant 0 : i32
    return %arg0, %c0_i32, %c0_i32_0 : i32, i32, i32
  }
  func.func @transform_1(%arg0: i32) -> (i32, i32) {
    %c0_i32 = arith.constant 0 : i32
    %c0_i32_0 = arith.constant 0 : i32
    %c0_i32_1 = arith.constant 0 : i32
    return %c0_i32, %c0_i32_0 : i32, i32
  }
  func.func @transform_2(%arg0: i32) -> (i32, i32, i32) {
    %c0_i32 = arith.constant 0 : i32
    %c0_i32_0 = arith.constant 0 : i32
    %c0_i32_1 = arith.constant 0 : i32
    return %arg0, %c0_i32, %c0_i32_0 : i32, i32, i32
  }
}

</mosaic_0001>

<llo_original>
// kernel: tpu_custom_call.1
$region0: #{tpu_custom_call.1}
  #allocation0 [shape = 'u32[]', space=smem, size = 0x4, offset = 0x4, fixed_abs, tag = 'smem constant byte address 0x4 - core index']
  #allocation1 [shape = 'u32[72,128]{1,0:T(1,128)}', space=vmem, size = 0x9000, scoped, tag = 'internal scratch']
  %s0 = inlined_call_operand.hbm [shape: f32[2,40,256], index: 0, kind: input, shape index: {}]
  %s1 = inlined_call_operand.hbm [shape: f32[8,40], index: 1, kind: input, shape index: {}]
  %s2 = inlined_call_operand.hbm [shape: f32[2,8,256], index: 2, kind: output, shape index: {}]
  %s3 = sld [smem:[#allocation0]]
  $region49: #{tpu_custom_call.1} parent=0
    _
  %s5 = ssub.s32 1, %s3
  %s6 = scalar_select 0, %s5, %s3
  $region1: #{tpu_custom_call.1} parent=0
    #allocation2 [shape = 'u8[81920]{0}', space=vmem, size = 0x14000, scoped, tag = 'input window, operand 0']
    #allocation3 [shape = 's32[2]{0}', space=sflag, size = 0x8, scoped, tag = 'scoped memory for tpu_custom_call.1']
    #allocation4 [shape = 's32[2]{0}', space=sflag, size = 0x8, scoped, tag = 'scoped memory for tpu_custom_call.1']
    #allocation5 [shape = 'u8[4096]{0}', space=vmem, size = 0x1000, scoped, tag = 'input window, operand 1, single buffered']
    #allocation6 [shape = 's32[1]{0}', space=sflag, size = 0x4, scoped, tag = 'scoped memory for tpu_custom_call.1']
    #allocation7 [shape = 'u8[16384]{0}', space=vmem, size = 0x4000, scoped, tag = 'output window, operand 0']
    %7 = vsyncpa [#allocation3], 0
    %s8 = scalar_lea.sflag [#allocation3], 1
    %9 = vsyncpa %s8, 0
    %10 = vsyncpa [#allocation6], 0
    %11 = vsyncpa [#allocation4], 0
    %s12 = scalar_lea.sflag [#allocation4], 1
    %13 = vsyncpa %s12, 0
    loop: start=0, step=1, limit=4
    $region2: #{tpu_custom_call.1} parent=1 // loop_pre_header
      _
    $region3: #{tpu_custom_call.1} parent=1 // loop_header
      %s15 = sphi 0, %s19
      %p16 = scmp.ge.s32.totalorder %s15, 4
      %s25 = sphi 0, %s27
      %s28 = sphi 0, %s25
      %s29 = sphi 0, %s28
      %s45 = sphi 0, %s29
      %s49 = sphi 0, %s49
      %s51 = sphi 0, %s49
      %s52 = sphi 0, %s51
      %s66 = sphi 0, %s52
      %s72 = sphi 0, %s74
      %s75 = sphi 0, %s72
      %s76 = sphi 0, %s75
      %s92 = sphi 0, %s76
    $region4: #{tpu_custom_call.1} parent=1 // loop_header_branch
      %18 = sbr.rel (%p16) target = $region8
    $region5: #{tpu_custom_call.1} parent=1 // loop_body
      %s20 = ssub.s32 %s15, 1
      %s21 = ssub.s32 %s15, 2
      %s22 = sadd.s32 %s15, 1
      %s23 = ssub.s32 %s15, %s22
      %p24 = scmp.eq.s32.totalorder %s23, 0
      %s26 = sadd.s32 %s25, 1
      %s27 = scalar_select %p24, %s25, %s26
      %p30 = pneg %p24
      %p31 = scmp.eq.s32.totalorder %s15, 1
      %p32 = por %p30, %p31
      %p33 = scmp.ne.s32.totalorder %s25, %s28
      %p34 = scmp.eq.s32.totalorder %s15, 0
      %p35 = por %p33, %p34
      %p36 = scmp.ne.s32.totalorder %s25, %s28
      %p37 = scmp.eq.s32.totalorder %s20, 1
      %p38 = por %p36, %p37
      %p39 = scmp.ne.s32.totalorder %s28, %s29
      %p40 = scmp.eq.s32.totalorder %s20, 0
      %p41 = por %p39, %p40
      %p42 = scmp.ne.s32.totalorder %s28, %s29
      %p43 = scmp.eq.s32.totalorder %s21, 1
      %p44 = por %p42, %p43
      %p46 = scmp.ne.s32.totalorder %s29, %s45
      %p47 = scmp.eq.s32.totalorder %s21, 0
      %p48 = por %p46, %p47
      %s50 = sadd.s32 %s49, 1
      %p53 = scmp.eq.s32.totalorder %s15, 1
      %p54 = scmp.ne.s32.totalorder %s49, %s51
      %p55 = scmp.eq.s32.totalorder %s15, 0
      %p56 = por %p54, %p55
      %p57 = scmp.ne.s32.totalorder %s49, %s51
      %p58 = scmp.eq.s32.totalorder %s20, 1
      %p59 = por %p57, %p58
      %p60 = scmp.ne.s32.totalorder %s51, %s52
      %p61 = scmp.eq.s32.totalorder %s20, 0
      %p62 = por %p60, %p61
      %p63 = scmp.ne.s32.totalorder %s51, %s52
      %p64 = scmp.eq.s32.totalorder %s21, 1
      %p65 = por %p63, %p64
      %p67 = scmp.ne.s32.totalorder %s52, %s66
      %p68 = scmp.eq.s32.totalorder %s21, 0
      %p69 = por %p67, %p68
      %s70 = ssub.s32 %s15, %s22
      %p71 = scmp.eq.s32.totalorder %s70, 0
      %s73 = sadd.s32 %s72, 1
      %s74 = scalar_select %p71, %s72, %s73
      %p77 = pneg %p71
      %p78 = scmp.eq.s32.totalorder %s15, 1
      %p79 = por %p77, %p78
      %p80 = scmp.ne.s32.totalorder %s72, %s75
      %p81 = scmp.eq.s32.totalorder %s15, 0
      %p82 = por %p80, %p81
      %p83 = scmp.ne.s32.totalorder %s72, %s75
      %p84 = scmp.eq.s32.totalorder %s20, 1
      %p85 = por %p83, %p84
      %p86 = scmp.ne.s32.totalorder %s75, %s76
      %p87 = scmp.eq.s32.totalorder %s20, 0
      %p88 = por %p86, %p87
      %p89 = scmp.ne.s32.totalorder %s75, %s76
      %p90 = scmp.eq.s32.totalorder %s21, 1
      %p91 = por %p89, %p90
      %p93 = scmp.ne.s32.totalorder %s76, %s92
      %p94 = scmp.eq.s32.totalorder %s21, 0
      %p95 = por %p93, %p94
      %p96 = scmp.le.s32.totalorder 1, %s15
      %p97 = scmp.lt.s32.totalorder %s15, 3
      %p98 = pnand %p96, %p97
      %p99 = pneg %p98
      // Predicated region
      $region9: #{tpu_custom_call.1} parent=5 // pred_check
        _
      $region10: #{tpu_custom_call.1} parent=5 // pred_check_branch
        %101 = sbr.rel (%p98) target = $region12
      $region11: #{tpu_custom_call.1} parent=5 // pred_region
        %s102 = ssub.s32 %s15, 1
        // Predicated region
        $region13: #{tpu_custom_call.1} parent=11 // pred_check
          %p103 = pneg %p62
        $region14: #{tpu_custom_call.1} parent=11 // pred_check_branch
          %105 = sbr.rel (%p103) target = $region16
        $region15: #{tpu_custom_call.1} parent=11 // pred_region
          %107 = vsyncadd [#allocation6], 0
          %s109 = sshll.u32 %s1, 4
          %s110 = int_to_ptr.hbm [resolvable:$true] %s109
          %s111 = sshll.u32 [#allocation5], 4
          %s112 = int_to_ptr.vmem [resolvable:$true] %s111
          %114 = dma.hbm_to_vmem [thread:$0]  %s110, 128, %s112, [#allocation6]
        $region16: #{tpu_custom_call.1} parent=11 // pred_fallthru
          _
      $region12: #{tpu_custom_call.1} parent=5 // pred_fallthru
        _
      %p115 = scmp.lt.s32.totalorder %s15, 2
      // Predicated region
      $region17: #{tpu_custom_call.1} parent=5 // pred_check
        %p116 = pneg %p115
      $region18: #{tpu_custom_call.1} parent=5 // pred_check_branch
        %118 = sbr.rel (%p116) target = $region20
      $region19: #{tpu_custom_call.1} parent=5 // pred_region
        // Predicated region
        $region21: #{tpu_custom_call.1} parent=19 // pred_check
          %p119 = pneg %p35
        $region22: #{tpu_custom_call.1} parent=19 // pred_check_branch
          %121 = sbr.rel (%p119) target = $region24
        $region23: #{tpu_custom_call.1} parent=19 // pred_region
          %s122 = sand.u32 %s25, 1
          %s123 = scalar_lea.sflag [#allocation3], %s122
          %s124 = sand.u32 %s25, 1
          %s125 = smul.addr %s124, 80
          %s126 = scalar_lea.vmem [#allocation2], %s125
          %128 = vsyncadd %s123, 0
          %s129 = smul.addr %s15, 10
          %s130 = smul.addr %s129, 8
          %s131 = scalar_lea.hbm %s0, %s130
          %s132 = sshll.u32 %s131, 4
          %s133 = int_to_ptr.hbm [resolvable:$true] %s132
          %s134 = sshll.u32 %s126, 4
          %s135 = int_to_ptr.vmem [resolvable:$true] %s134
          %140 = dma.hbm_to_vmem [thread:$0]  %s133, 1280, %s135, %s123, 256, 256, 16
        $region24: #{tpu_custom_call.1} parent=19 // pred_fallthru
          _
      $region20: #{tpu_custom_call.1} parent=5 // pred_fallthru
        _
      %p141 = scmp.le.s32.totalorder 1, %s15
      %p142 = scmp.lt.s32.totalorder %s15, 3
      %p143 = pnand %p141, %p142
      %p144 = pneg %p143
      // Predicated region
      $region25: #{tpu_custom_call.1} parent=5 // pred_check
        _
      $region26: #{tpu_custom_call.1} parent=5 // pred_check_branch
        %146 = sbr.rel (%p143) target = $region28
      $region27: #{tpu_custom_call.1} parent=5 // pred_region
        %s147 = ssub.s32 %s15, 1
        %s148 = sand.u32 %s28, 1
        %s149 = scalar_lea.sflag [#allocation3], %s148
        %s150 = sand.u32 %s28, 1
        %s151 = smul.addr %s150, 80
        %s152 = scalar_lea.vmem [#allocation2], %s151
        // Predicated region
        $region29: #{tpu_custom_call.1} parent=27 // pred_check
          %p153 = pneg %p41
        $region30: #{tpu_custom_call.1} parent=27 // pred_check_branch
          %155 = sbr.rel (%p153) target = $region32
        $region31: #{tpu_custom_call.1} parent=27 // pred_region
          %157 = dma.done %s149, 1280
        $region32: #{tpu_custom_call.1} parent=27 // pred_fallthru
          _
        // Predicated region
        $region33: #{tpu_custom_call.1} parent=27 // pred_check
          %p158 = pneg %p62
        $region34: #{tpu_custom_call.1} parent=27 // pred_check_branch
          %160 = sbr.rel (%p158) target = $region36
        $region35: #{tpu_custom_call.1} parent=27 // pred_region
          %162 = dma.done [#allocation6], 128
        $region36: #{tpu_custom_call.1} parent=27 // pred_fallthru
          _
        %s163 = sand.u32 %s28, 1
        %s164 = scalar_lea.sflag [#allocation3], %s163
        %s165 = sand.u32 %s28, 1
        %s166 = smul.addr %s165, 80
        %s167 = scalar_lea.vmem [#allocation2], %s166
        %p168 = pneg %p41
        %p169 = pneg %p38
        %p170 = pneg %p62
        %p171 = pneg %p59
        %p172 = pneg %p88
        %p173 = pneg %p85
        %s174 = sand.u32 %s75, 1
        %s175 = scalar_lea.sflag [#allocation4], %s174
        %s176 = sand.u32 %s75, 1
        %s177 = smul.addr %s176, 16
        %s178 = scalar_lea.vmem [#allocation7], %s177
        %v179 = vld [vmem:[%s152] sm:$0xff]
        %v180 = vld [vmem:[%s152 + $0x8] sm:$0xff]
        %v181 = vld [vmem:[%s152 + $0x10] sm:$0xff]
        %v182 = vld [vmem:[%s152 + $0x18] sm:$0xff]
        %v183 = vld [vmem:[%s152 + $0x20] sm:$0xff]
        %v184 = vld [vmem:[%s152 + $0x28] sm:$0xff]
        %v185 = vld [vmem:[%s152 + $0x30] sm:$0xff]
        %v186 = vld [vmem:[%s152 + $0x38] sm:$0xff]
        %v187 = vld [vmem:[%s152 + $0x40] sm:$0xff]
        %v188 = vld [vmem:[%s152 + $0x48] sm:$0xff]
        %v189 = vld [vmem:[#allocation5] sm:$0xff]
        %vm190 = vcmask 326656
        %v192 = vsel %vm190, %v189, 0
        %194 = vmatpush.msra.mxu0 0.0
        %195 = vmatpush.msra.mxu0 0.0
        %196 = vmatpush.msra.mxu0 0.0
        %197 = vmatpush.msra.mxu0 0.0
        %198 = vmatpush.msra.mxu0 0.0
        %199 = vmatpush.msra.mxu0 0.0
        %200 = vmatpush.msra.mxu0 0.0
        %201 = vmatpush.msra.mxu0 0.0
        %202 = vmatpush.msra.mxu0 0.0
        %203 = vmatpush.msra.mxu0 0.0
        %204 = vmatpush.msra.mxu0 0.0
        %205 = vmatpush.msra.mxu0 %v187
        %206 = vmatpush.msra.mxu0 %v185
        %207 = vmatpush.msra.mxu0 %v183
        %208 = vmatpush.msra.mxu0 %v181
        %209 = vmatpush.msra.mxu0 %v179
        %210 = vmatmul.f32.gmra.mxu0 %v192
        %v211 = vpop.f32.mrf.mxu0
        %v212 = vadd.f32 0.0, %v211
        %213 = vdwg.mxu0
        %214 = vmatpush.msra.mxu0 0.0
        %215 = vmatpush.msra.mxu0 0.0
        %216 = vmatpush.msra.mxu0 0.0
        %217 = vmatpush.msra.mxu0 0.0
        %218 = vmatpush.msra.mxu0 0.0
        %219 = vmatpush.msra.mxu0 0.0
        %220 = vmatpush.msra.mxu0 0.0
        %221 = vmatpush.msra.mxu0 0.0
        %222 = vmatpush.msra.mxu0 0.0
        %223 = vmatpush.msra.mxu0 0.0
        %224 = vmatpush.msra.mxu0 0.0
        %225 = vmatpush.msra.mxu0 %v188
        %226 = vmatpush.msra.mxu0 %v186
        %227 = vmatpush.msra.mxu0 %v184
        %228 = vmatpush.msra.mxu0 %v182
        %229 = vmatpush.msra.mxu0 %v180
        %230 = vmatmul.f32.gmra.mxu0 %v192
        %v231 = vpop.f32.mrf.mxu0
        %v232 = vadd.f32 0.0, %v231
        %233 = vdwg.mxu0
        %v234 = vadd.f32 %v212, %v232
        %235 = vadd.xlane.f32.xlu0 %v234
        %v236 = vpop.xlane.xlu0 %235
        %v237 = vmul.f32 %v236, 0.00390625
        %v238 = vsub.f32 %v212, %v237
        %v239 = vsub.f32 %v232, %v237
        %v240 = vmul.f32 %v238, %v238
        %v241 = vmul.f32 %v239, %v239
        %v242 = vadd.f32 %v240, %v241
        %243 = vadd.xlane.f32.xlu0 %v242
        %v244 = vpop.xlane.xlu0 %243
        %v245 = vmul.f32 %v244, 0.003921569
        %v246 = vadd.f32 %v245, 0.0001
        %v247 = vmul.f32 %v246, 4.0
        %v248 = vrcp.pop %v247
        %v249 = vmul.f32 %v247, %v248
        %v250 = vsub.f32 1.0, %v249
        %v251 = vmul.f32 %v248, %v250
        %v252 = vadd.f32 %v248, %v251
        %vm253 = vweird.f32 %v247
        %vm254 = vweird.f32 %v248
        %vm255 = vmor %vm253, %vm254
        %v256 = vsel %vm255, %v248, %v252
        %v257 = vand.u32 2147483647, %v247
        %vm258 = vcmp.eq.f32.partialorder %v257, 8.507059e+37
        %v259 = vand.u32 %v247, 2147483648
        %v260 = vor.u32 1.1754944e-38, %v259
        %v261 = vsel %vm258, %v260, %v256
        %v262 = vmul.f32 1.0, %v261
        %v263 = vmul.f32 %v240, %v262
        %v264 = vmul.f32 %v241, %v262
        %v265 = vadd.f32 %v263, 0.5
        %v266 = vadd.f32 %v264, 0.5
        %v267 = vxor.u32 %v265, 2147483648
        %v268 = vxor.u32 %v266, 2147483648
        %v269 = vmul.f32 %v267, 1.442695
        %v270 = vpow.pop %v269
        %v271 = vmul.f32 %v268, 1.442695
        %v272 = vpow.pop %v271
        %v273 = vadd.f32 %v270, 1.0
        %v274 = vadd.f32 %v272, 1.0
        %v275 = vrcp.pop %v273
        %v276 = vmul.f32 %v273, %v275
        %v277 = vsub.f32 1.0, %v276
        %v278 = vmul.f32 %v275, %v277
        %v279 = vadd.f32 %v275, %v278
        %vm280 = vweird.f32 %v273
        %vm281 = vweird.f32 %v275
        %vm282 = vmor %vm280, %vm281
        %v283 = vsel %vm282, %v275, %v279
        %v284 = vand.u32 2147483647, %v273
        %vm285 = vcmp.eq.f32.partialorder %v284, 8.507059e+37
        %v286 = vand.u32 %v273, 2147483648
        %v287 = vor.u32 1.1754944e-38, %v286
        %v288 = vsel %vm285, %v287, %v283
        %v289 = vmul.f32 1.0, %v288
        %v290 = vrcp.pop %v274
        %v291 = vmul.f32 %v274, %v290
        %v292 = vsub.f32 1.0, %v291
        %v293 = vmul.f32 %v290, %v292
        %v294 = vadd.f32 %v290, %v293
        %vm295 = vweird.f32 %v274
        %vm296 = vweird.f32 %v290
        %vm297 = vmor %vm295, %vm296
        %v298 = vsel %vm297, %v290, %v294
        %v299 = vand.u32 2147483647, %v274
        %vm300 = vcmp.eq.f32.partialorder %v299, 8.507059e+37
        %v301 = vand.u32 %v274, 2147483648
        %v302 = vor.u32 1.1754944e-38, %v301
        %v303 = vsel %vm300, %v302, %v298
        %v304 = vmul.f32 1.0, %v303
        %v305 = vmul.f32 %v212, %v289
        %v306 = vmul.f32 %v232, %v304
        %v307 = vadd.f32 %v305, %v306
        %308 = vadd.xlane.f32.xlu0 %v307
        %v309 = vpop.xlane.xlu0 %308
        %v310 = vmul.f32 %v309, 0.00390625
        %v311 = vsub.f32 %v305, %v310
        %v312 = vsub.f32 %v306, %v310
        %v313 = vmul.f32 %v311, %v311
        %v314 = vmul.f32 %v312, %v312
        %v315 = vadd.f32 %v313, %v314
        %316 = vadd.xlane.f32.xlu0 %v315
        %v317 = vpop.xlane.xlu0 %316
        %v318 = vmul.f32 %v317, 0.00390625
        %v319 = vadd.f32 %v318, 1e-05
        %v320 = vrsqrt.pop %v319
        %v321 = vmul.f32 %v320, %v319
        %v322 = vmul.f32 %v321, %v320
        %v323 = vmul.f32 0.5, %v322
        %v324 = vsub.f32 1.5, %v323
        %v325 = vmul.f32 %v320, %v324
        %vm326 = vweird.f32 %v319
        %vm327 = vweird.f32 %v320
        %vm328 = vmor %vm326, %vm327
        %v329 = vsel %vm328, %v320, %v325
        %v330 = vmul.f32 %v311, %v329
        %v331 = vmul.f32 %v312, %v329
        %v332 = vmax.f32 %v330, 0.0
        %v333 = vmax.f32 %v331, 0.0
        %334 = vst [vmem:[%s178] sm:$0xff] %v332
        %335 = vst [vmem:[%s178 + $0x8] sm:$0xff] %v333
        %s336 = sand.u32 %s75, 1
        %s337 = scalar_lea.sflag [#allocation4], %s336
        %s338 = sand.u32 %s75, 1
        %s339 = smul.addr %s338, 16
        %s340 = scalar_lea.vmem [#allocation7], %s339
        // Predicated region
        $region37: #{tpu_custom_call.1} parent=27 // pred_check
          %p341 = pneg %p85
        $region38: #{tpu_custom_call.1} parent=27 // pred_check_branch
          %343 = sbr.rel (%p341) target = $region40
        $region39: #{tpu_custom_call.1} parent=27 // pred_region
          %345 = vsyncadd %s337, 0
          %s346 = smul.addr %s20, 2
          %s347 = smul.addr %s346, 8
          %s348 = scalar_lea.hbm %s2, %s347
          %s350 = sshll.u32 %s340, 4
          %s351 = int_to_ptr.vmem [resolvable:$true] %s350
          %s352 = sshll.u32 %s348, 4
          %s353 = int_to_ptr.hbm [resolvable:$true] %s352
          %355 = dma.vmem_to_hbm [thread:$0]  %s351, 256, %s353, %s337
        $region40: #{tpu_custom_call.1} parent=27 // pred_fallthru
          _
      $region28: #{tpu_custom_call.1} parent=5 // pred_fallthru
        _
      %p356 = scmp.le.s32.totalorder 2, %s15
      // Predicated region
      $region41: #{tpu_custom_call.1} parent=5 // pred_check
        %p357 = pneg %p356
      $region42: #{tpu_custom_call.1} parent=5 // pred_check_branch
        %359 = sbr.rel (%p357) target = $region44
      $region43: #{tpu_custom_call.1} parent=5 // pred_region
        %s360 = ssub.s32 %s15, 2
        // Predicated region
        $region45: #{tpu_custom_call.1} parent=43 // pred_check
          %p361 = pneg %p91
        $region46: #{tpu_custom_call.1} parent=43 // pred_check_branch
          %363 = sbr.rel (%p361) target = $region48
        $region47: #{tpu_custom_call.1} parent=43 // pred_region
          %s364 = sand.u32 %s76, 1
          %s365 = scalar_lea.sflag [#allocation4], %s364
          %s366 = sand.u32 %s76, 1
          %s367 = smul.addr %s366, 16
          %s368 = scalar_lea.vmem [#allocation7], %s367
          %370 = dma.done %s365, 256
        $region48: #{tpu_custom_call.1} parent=43 // pred_fallthru
          _
      $region44: #{tpu_custom_call.1} parent=5 // pred_fallthru
        _
    $region6: #{tpu_custom_call.1} parent=1 // loop_footer
      %s19 = sadd.s32 1, %s15
    $region7: #{tpu_custom_call.1} parent=1 // loop_footer_branch
      %14 = sbr.rel target = $region3
    $region8: #{tpu_custom_call.1} parent=1 // loop_exit
      _
    %371 = vsyncpa [#allocation3], 1
    %s372 = scalar_lea.sflag [#allocation3], 1
    %373 = vsyncpa %s372, 1
    %374 = vsyncpa [#allocation6], 1
    %375 = vsyncpa [#allocation4], 1
    %s376 = scalar_lea.sflag [#allocation4], 1
    %377 = vsyncpa %s376, 1

</llo_original>
